<compile_context>
chip_gen: v7x
topology: tpu7x:2x2x1
jax: 0.10.0
libtpu: 0.0.40
codegen_flags: <defaults>
</compile_context>

<pallas_src>
import functools

import jax
import jax.numpy as jnp
from jax import lax
from jax.experimental import pallas as pl
from jax.experimental.pallas import tpu as pltpu

_LANES = 128
_SUBLANES = 8
_CHUNK = _SUBLANES * _LANES  # 1024 elements per 8x128 chunk


def _neg_pearson_kernel(pred_ref, true_ref, corr_ref,
                        sp_ref, st_ref, spp_ref, stt_ref, spt_ref,
                        shift_p_ref, shift_t_ref,
                        *, n_valid, tile_rows, n_chunks, needs_mask, unroll):
    """Grid = (B, num_k).  pred/true blocks are (1, tile_rows, 128)."""
    k = pl.program_id(1)

    @pl.when(k == 0)
    def _init():
        # Per-batch mean estimate from the first 8x128 chunk.  Any padded
        # lanes inside it are genuine zeros (from jnp.pad), so dividing by the
        # static valid count gives the exact mean of those elements.  Pearson
        # is invariant to a uniform shift, so any estimate keeps the result
        # exact while killing catastrophic cancellation in the one-pass sums.
        inv_cnt = jnp.float32(1.0 / min(n_valid, _CHUNK))
        p0 = pred_ref[0, pl.ds(0, _SUBLANES), :].astype(jnp.float32)
        t0 = true_ref[0, pl.ds(0, _SUBLANES), :].astype(jnp.float32)
        shift_p_ref[...] = jnp.full((_SUBLANES, _LANES), jnp.sum(p0) * inv_cnt,
                                    dtype=jnp.float32)
        shift_t_ref[...] = jnp.full((_SUBLANES, _LANES), jnp.sum(t0) * inv_cnt,
                                    dtype=jnp.float32)
        sp_ref[...] = jnp.zeros_like(sp_ref)
        st_ref[...] = jnp.zeros_like(st_ref)
        spp_ref[...] = jnp.zeros_like(spp_ref)
        stt_ref[...] = jnp.zeros_like(stt_ref)
        spt_ref[...] = jnp.zeros_like(spt_ref)

    s_p = shift_p_ref[...]   # (8, 128) splat of the per-batch shift
    s_t = shift_t_ref[...]

    # First flattened-element index covered by this k block.
    base_elem = k * (tile_rows * _LANES)
    if needs_mask:
        offs = (lax.broadcasted_iota(jnp.int32, (_SUBLANES, _LANES), 0) * _LANES
                + lax.broadcasted_iota(jnp.int32, (_SUBLANES, _LANES), 1))

    def body(i, carry):
        sp, st, spp, stt, spt = carry
        r0 = pl.multiple_of(i * _SUBLANES, _SUBLANES)
        # Cast + shift on one vreg-sized chunk; stays register-resident.
        p = pred_ref[0, pl.ds(r0, _SUBLANES), :].astype(jnp.float32) - s_p
        t = true_ref[0, pl.ds(r0, _SUBLANES), :].astype(jnp.float32) - s_t
        if needs_mask:
            valid = (base_elem + i * _CHUNK + offs) < n_valid
            p = jnp.where(valid, p, 0.0)
            t = jnp.where(valid, t, 0.0)
        return (sp + p, st + t, spp + p * p, stt + t * t, spt + p * t)

    carry = (sp_ref[...], st_ref[...], spp_ref[...], stt_ref[...], spt_ref[...])
    sp, st, spp, stt, spt = lax.fori_loop(0, n_chunks, body, carry,
                                          unroll=unroll)
    sp_ref[...] = sp
    st_ref[...] = st
    spp_ref[...] = spp
    stt_ref[...] = stt
    spt_ref[...] = spt

    @pl.when(k == pl.num_programs(1) - 1)
    def _finalize():
        n = jnp.float32(n_valid)
        sum_p = jnp.sum(sp_ref[...])
        sum_t = jnp.sum(st_ref[...])
        sum_pp = jnp.sum(spp_ref[...])
        sum_tt = jnp.sum(stt_ref[...])
        sum_pt = jnp.sum(spt_ref[...])
        cov = sum_pt - sum_p * sum_t / n
        var_p = jnp.maximum(sum_pp - sum_p * sum_p / n, 0.0)
        var_t = jnp.maximum(sum_tt - sum_t * sum_t / n, 0.0)
        # Keep the exact eps placement of the PyTorch module.
        denom = jnp.sqrt(var_p) * jnp.sqrt(var_t) + jnp.float32(1e-8)
        corr_ref[...] = jnp.full(corr_ref.shape, cov / denom,
                                 dtype=jnp.float32)


def negative_pearson_correlation(y_pred, y_true, *, max_rows_per_tile=1024):
    """JAX/Pallas equivalent of NegativePearsonCorrelation.forward."""
    assert y_pred.shape == y_true.shape, "y_pred / y_true shape mismatch"
    B = y_pred.shape[0]
    # torch .view(B, -1); keep native dtype (cast happens inside the kernel).
    yp = jnp.reshape(y_pred, (B, -1))
    yt = jnp.reshape(y_true, (B, -1))
    N = yp.shape[1]

    # Lane/sublane-dense layout: rows of 128 lanes, rows a multiple of 8.
    group = _SUBLANES * _LANES
    n_grouped = -(-N // group) * group
    if n_grouped != N:
        # Pad only to the next 8x128 group (needed for the dense reshape).
        # The pad values are masked in-kernel, so correctness never depends
        # on them; for aligned feature maps this branch never runs and there
        # is no extra HBM pass over the inputs.
        # TODO(synk): an in-kernel sub-8-row tail would also avoid this copy
        # for N % 128 == 0 but N % 1024 != 0.
        yp = jnp.pad(yp, ((0, 0), (0, n_grouped - N)))
        yt = jnp.pad(yt, ((0, 0), (0, n_grouped - N)))
    rows = n_grouped // _LANES  # always a multiple of 8

    if rows <= max_rows_per_tile:
        tile_rows = rows                 # one k block, exactly covers rows
        num_k = 1
    else:
        tile_rows = max(_SUBLANES,
                        (max_rows_per_tile // _SUBLANES) * _SUBLANES)
        num_k = -(-rows // tile_rows)    # partial tail block masked in-kernel

    yp3 = yp.reshape(B, rows, _LANES)
    yt3 = yt.reshape(B, rows, _LANES)

    n_chunks = tile_rows // _SUBLANES
    needs_mask = (num_k * tile_rows * _LANES) != N
    unroll = max(1, min(8, n_chunks))

    kernel = functools.partial(
        _neg_pearson_kernel, n_valid=N, tile_rows=tile_rows,
        n_chunks=n_chunks, needs_mask=needs_mask, unroll=unroll)

    itemsize = jnp.dtype(yp3.dtype).itemsize
    corr = pl.pallas_call(
        kernel,
        out_shape=jax.ShapeDtypeStruct((B, 1, 1), jnp.float32),
        grid_spec=pltpu.PrefetchScalarGridSpec(
            num_scalar_prefetch=0,
            grid=(B, num_k),
            in_specs=[
                pl.BlockSpec((1, tile_rows, _LANES), lambda b, k: (b, k, 0)),
                pl.BlockSpec((1, tile_rows, _LANES), lambda b, k: (b, k, 0)),
            ],
            out_specs=pl.BlockSpec((1, 1, 1), lambda b, k: (b, 0, 0)),
            scratch_shapes=[pltpu.VMEM((_SUBLANES, _LANES), jnp.float32)
                            for _ in range(7)],
        ),
        compiler_params=pltpu.CompilerParams(
            dimension_semantics=("parallel", "arbitrary"),
        ),
        cost_estimate=pl.CostEstimate(
            flops=10 * B * rows * _LANES,
            transcendentals=4 * B,
            bytes_accessed=2 * B * rows * _LANES * itemsize + 4 * B,
        ),
    )(yp3, yt3)

    # Tiny O(B) epilogue: negative mean over the batch.
    return -jnp.mean(corr[:, 0, 0])


def _reference(y_pred, y_true):
    """Pure-JAX centered reference (mirrors the PyTorch module)."""
    B = y_pred.shape[0]
    p = jnp.reshape(y_pred, (B, -1)).astype(jnp.float32)
    t = jnp.reshape(y_true, (B, -1)).astype(jnp.float32)
    pm = jnp.mean(p, axis=1, keepdims=True)
    tm = jnp.mean(t, axis=1, keepdims=True)
    pd = p - pm
    td = t - tm
    cov = jnp.sum(pd * td, axis=1)
    pv = jnp.sum(pd * pd, axis=1)
    tv = jnp.sum(td * td, axis=1)
    corr = cov / (jnp.sqrt(pv) * jnp.sqrt(tv) + 1e-8)
    return -jnp.mean(corr)


if __name__ == "__main__":
    key = jax.random.PRNGKey(0)
    k1, k2, k3, k4, k5, k6 = jax.random.split(key, 6)

    # (B, C, H, W) CNN-style maps with a non-zero mean (exercises the
    # cancellation-safe shifted accumulation). N = 4*16*16 = 1024 (aligned).
    y_pred = 5.0 + jax.random.normal(k1, (2, 4, 16, 16), dtype=jnp.float32)
    y_true = 5.0 + 0.5 * y_pred + jax.random.normal(k2, (2, 4, 16, 16),
                                                    dtype=jnp.float32)
    loss = jax.block_until_ready(negative_pearson_correlation(y_pred, y_true))
    ref = _reference(y_pred, y_true)
    assert jnp.allclose(loss, ref, atol=1e-4, rtol=1e-4), (loss, ref)

    # Unaligned N (3*10*10 = 300): exercises in-kernel masking + minimal pad.
    yp_u = 2.0 + jax.random.normal(k3, (2, 3, 10, 10), dtype=jnp.float32)
    yt_u = 2.0 + jax.random.normal(k4, (2, 3, 10, 10), dtype=jnp.float32)
    loss_u = jax.block_until_ready(negative_pearson_correlation(yp_u, yt_u))
    ref_u = _reference(yp_u, yt_u)
    assert jnp.allclose(loss_u, ref_u, atol=1e-4, rtol=1e-4), (loss_u, ref_u)

    # Multi-k reduction path with a masked tail block (N = 5*16*16 = 1280,
    # forced tiny tile -> grid k = 2).
    yp_m = 3.0 + jax.random.normal(k5, (2, 5, 16, 16), dtype=jnp.float32)
    yt_m = 3.0 + jax.random.normal(k6, (2, 5, 16, 16), dtype=jnp.float32)
    loss_m = jax.block_until_ready(
        negative_pearson_correlation(yp_m, yt_m, max_rows_per_tile=8))
    ref_m = _reference(yp_m, yt_m)
    assert jnp.allclose(loss_m, ref_m, atol=1e-4, rtol=1e-4), (loss_m, ref_m)

    # Native-bf16 inputs: HBM traffic stays bf16; cast to f32 only in-kernel.
    yp_bf = y_pred.astype(jnp.bfloat16)
    yt_bf = y_true.astype(jnp.bfloat16)
    loss_bf = jax.block_until_ready(negative_pearson_correlation(yp_bf, yt_bf))
    ref_bf = _reference(yp_bf, yt_bf)
    assert jnp.allclose(loss_bf, ref_bf, atol=2e-3, rtol=2e-3), (loss_bf, ref_bf)

    print("KERNEL_OK")
</pallas_src>

<mosaic_0001>
module attributes {stable_mosaic.version = 11 : i64} {
  func.func @_neg_pearson_kernel(%arg0: i32, %arg1: i32, %arg2: memref<1x8x128xf32, #tpu.memory_space<vmem>>, %arg3: memref<1x8x128xf32, #tpu.memory_space<vmem>>, %arg4: memref<1x1x1xf32, #tpu.memory_space<vmem>>, %arg5: memref<8x128xf32, #tpu.memory_space<vmem>>, %arg6: memref<8x128xf32, #tpu.memory_space<vmem>>, %arg7: memref<8x128xf32, #tpu.memory_space<vmem>>, %arg8: memref<8x128xf32, #tpu.memory_space<vmem>>, %arg9: memref<8x128xf32, #tpu.memory_space<vmem>>, %arg10: memref<8x128xf32, #tpu.memory_space<vmem>>, %arg11: memref<8x128xf32, #tpu.memory_space<vmem>>) attributes {dimension_semantics = [#tpu.dimension_semantics<parallel>, #tpu.dimension_semantics<arbitrary>], iteration_bounds = array<i64: 2, 1>, scalar_prefetch = 0 : i64, scratch_operands = 7 : i64, tpu.core_type = #tpu.core_type<tc>, window_params = [{transform_indices = @transform_0, window_bounds = array<i64: 1, 8, 128>}, {transform_indices = @transform_1, window_bounds = array<i64: 1, 8, 128>}, {transform_indices = @transform_2, window_bounds = array<i64: 1, 1, 1>}]} {
    %c0_i32 = arith.constant 0 : i32
    %0 = arith.cmpi eq, %arg1, %c0_i32 : i32
    %1 = arith.extui %0 : i1 to i32
    %c0_i32_0 = arith.constant 0 : i32
    %2 = arith.cmpi ne, %1, %c0_i32_0 : i32
    scf.if %2 {
      %c0_31 = arith.constant 0 : index
      %c0_32 = arith.constant 0 : index
      %c0_33 = arith.constant 0 : index
      %36 = vector.load %arg2[%c0_31, %c0_32, %c0_33] : memref<1x8x128xf32, #tpu.memory_space<vmem>>, vector<1x8x128xf32>
      %37 = vector.shape_cast %36 : vector<1x8x128xf32> to vector<8x128xf32>
      %c0_34 = arith.constant 0 : index
      %c0_35 = arith.constant 0 : index
      %c0_36 = arith.constant 0 : index
      %38 = vector.load %arg3[%c0_34, %c0_35, %c0_36] : memref<1x8x128xf32, #tpu.memory_space<vmem>>, vector<1x8x128xf32>
      %39 = vector.shape_cast %38 : vector<1x8x128xf32> to vector<8x128xf32>
      %40 = vector.shape_cast %37 : vector<8x128xf32> to vector<1x8x128xf32>
      %cst = arith.constant dense<0.000000e+00> : vector<1xf32>
      %41 = vector.multi_reduction <add>, %40, %cst [1, 2] : vector<1x8x128xf32> to vector<1xf32>
      %42 = vector.shape_cast %41 : vector<1xf32> to vector<1x1x1xf32>
      %43 = vector.extract %42[0, 0, 0] : f32 from vector<1x1x1xf32>
      %cst_37 = arith.constant 9.765625E-4 : f32
      %44 = arith.mulf %43, %cst_37 : f32
      %45 = vector.broadcast %44 : f32 to vector<8x128xf32>
      %c0_38 = arith.constant 0 : index
      %c0_39 = arith.constant 0 : index
      %46 = vector.load %arg10[%c0_38, %c0_39] : memref<8x128xf32, #tpu.memory_space<vmem>>, vector<8x128xf32>
      tpu.vector_store %arg10[%c0_38, %c0_39], %45 {strides = array<i32>} : memref<8x128xf32, #tpu.memory_space<vmem>>, vector<8x128xf32>,
      %47 = vector.shape_cast %39 : vector<8x128xf32> to vector<1x8x128xf32>
      %cst_40 = arith.constant dense<0.000000e+00> : vector<1xf32>
      %48 = vector.multi_reduction <add>, %47, %cst_40 [1, 2] : vector<1x8x128xf32> to vector<1xf32>
      %49 = vector.shape_cast %48 : vector<1xf32> to vector<1x1x1xf32>
      %50 = vector.extract %49[0, 0, 0] : f32 from vector<1x1x1xf32>
      %cst_41 = arith.constant 9.765625E-4 : f32
      %51 = arith.mulf %50, %cst_41 : f32
      %52 = vector.broadcast %51 : f32 to vector<8x128xf32>
      %c0_42 = arith.constant 0 : index
      %c0_43 = arith.constant 0 : index
      %53 = vector.load %arg11[%c0_42, %c0_43] : memref<8x128xf32, #tpu.memory_space<vmem>>, vector<8x128xf32>
      tpu.vector_store %arg11[%c0_42, %c0_43], %52 {strides = array<i32>} : memref<8x128xf32, #tpu.memory_space<vmem>>, vector<8x128xf32>,
      %cst_44 = arith.constant 0.000000e+00 : f32
      %54 = vector.broadcast %cst_44 : f32 to vector<8x128xf32>
      %c0_45 = arith.constant 0 : index
      %c0_46 = arith.constant 0 : index
      %55 = vector.load %arg5[%c0_45, %c0_46] : memref<8x128xf32, #tpu.memory_space<vmem>>, vector<8x128xf32>
      tpu.vector_store %arg5[%c0_45, %c0_46], %54 {strides = array<i32>} : memref<8x128xf32, #tpu.memory_space<vmem>>, vector<8x128xf32>,
      %cst_47 = arith.constant 0.000000e+00 : f32
      %56 = vector.broadcast %cst_47 : f32 to vector<8x128xf32>
      %c0_48 = arith.constant 0 : index
      %c0_49 = arith.constant 0 : index
      %57 = vector.load %arg6[%c0_48, %c0_49] : memref<8x128xf32, #tpu.memory_space<vmem>>, vector<8x128xf32>
      tpu.vector_store %arg6[%c0_48, %c0_49], %56 {strides = array<i32>} : memref<8x128xf32, #tpu.memory_space<vmem>>, vector<8x128xf32>,
      %cst_50 = arith.constant 0.000000e+00 : f32
      %58 = vector.broadcast %cst_50 : f32 to vector<8x128xf32>
      %c0_51 = arith.constant 0 : index
      %c0_52 = arith.constant 0 : index
      %59 = vector.load %arg7[%c0_51, %c0_52] : memref<8x128xf32, #tpu.memory_space<vmem>>, vector<8x128xf32>
      tpu.vector_store %arg7[%c0_51, %c0_52], %58 {strides = array<i32>} : memref<8x128xf32, #tpu.memory_space<vmem>>, vector<8x128xf32>,
      %cst_53 = arith.constant 0.000000e+00 : f32
      %60 = vector.broadcast %cst_53 : f32 to vector<8x128xf32>
      %c0_54 = arith.constant 0 : index
      %c0_55 = arith.constant 0 : index
      %61 = vector.load %arg8[%c0_54, %c0_55] : memref<8x128xf32, #tpu.memory_space<vmem>>, vector<8x128xf32>
      tpu.vector_store %arg8[%c0_54, %c0_55], %60 {strides = array<i32>} : memref<8x128xf32, #tpu.memory_space<vmem>>, vector<8x128xf32>,
      %cst_56 = arith.constant 0.000000e+00 : f32
      %62 = vector.broadcast %cst_56 : f32 to vector<8x128xf32>
      %c0_57 = arith.constant 0 : index
      %c0_58 = arith.constant 0 : index
      %63 = vector.load %arg9[%c0_57, %c0_58] : memref<8x128xf32, #tpu.memory_space<vmem>>, vector<8x128xf32>
      tpu.vector_store %arg9[%c0_57, %c0_58], %62 {strides = array<i32>} : memref<8x128xf32, #tpu.memory_space<vmem>>, vector<8x128xf32>,
    } else {
    }
    %c0 = arith.constant 0 : index
    %c0_1 = arith.constant 0 : index
    %3 = vector.load %arg10[%c0, %c0_1] : memref<8x128xf32, #tpu.memory_space<vmem>>, vector<8x128xf32>
    %c0_2 = arith.constant 0 : index
    %c0_3 = arith.constant 0 : index
    %4 = vector.load %arg11[%c0_2, %c0_3] : memref<8x128xf32, #tpu.memory_space<vmem>>, vector<8x128xf32>
    %c0_4 = arith.constant 0 : index
    %c0_5 = arith.constant 0 : index
    %5 = vector.load %arg5[%c0_4, %c0_5] : memref<8x128xf32, #tpu.memory_space<vmem>>, vector<8x128xf32>
    %c0_6 = arith.constant 0 : index
    %c0_7 = arith.constant 0 : index
    %6 = vector.load %arg6[%c0_6, %c0_7] : memref<8x128xf32, #tpu.memory_space<vmem>>, vector<8x128xf32>
    %c0_8 = arith.constant 0 : index
    %c0_9 = arith.constant 0 : index
    %7 = vector.load %arg7[%c0_8, %c0_9] : memref<8x128xf32, #tpu.memory_space<vmem>>, vector<8x128xf32>
    %c0_10 = arith.constant 0 : index
    %c0_11 = arith.constant 0 : index
    %8 = vector.load %arg8[%c0_10, %c0_11] : memref<8x128xf32, #tpu.memory_space<vmem>>, vector<8x128xf32>
    %c0_12 = arith.constant 0 : index
    %c0_13 = arith.constant 0 : index
    %9 = vector.load %arg9[%c0_12, %c0_13] : memref<8x128xf32, #tpu.memory_space<vmem>>, vector<8x128xf32>
    %c0_i32_14 = arith.constant 0 : i32
    %c8_i32 = arith.constant 8 : i32
    %10 = arith.muli %c0_i32_14, %c8_i32 : i32
    %11 = tpu.assume_multiple %10, 8 : i32
    %c0_15 = arith.constant 0 : index
    %12 = arith.index_cast %11 : i32 to index
    %c0_16 = arith.constant 0 : index
    %13 = vector.load %arg2[%c0_15, %12, %c0_16] : memref<1x8x128xf32, #tpu.memory_space<vmem>>, vector<1x8x128xf32>
    %14 = vector.shape_cast %13 : vector<1x8x128xf32> to vector<8x128xf32>
    %15 = arith.subf %14, %3 : vector<8x128xf32>
    %c0_17 = arith.constant 0 : index
    %16 = arith.index_cast %11 : i32 to index
    %c0_18 = arith.constant 0 : index
    %17 = vector.load %arg3[%c0_17, %16, %c0_18] : memref<1x8x128xf32, #tpu.memory_space<vmem>>, vector<1x8x128xf32>
    %18 = vector.shape_cast %17 : vector<1x8x128xf32> to vector<8x128xf32>
    %19 = arith.subf %18, %4 : vector<8x128xf32>
    %20 = arith.addf %5, %15 : vector<8x128xf32>
    %21 = arith.addf %6, %19 : vector<8x128xf32>
    %22 = arith.mulf %15, %15 : vector<8x128xf32>
    %23 = arith.addf %7, %22 : vector<8x128xf32>
    %24 = arith.mulf %19, %19 : vector<8x128xf32>
    %25 = arith.addf %8, %24 : vector<8x128xf32>
    %26 = arith.mulf %15, %19 : vector<8x128xf32>
    %27 = arith.addf %9, %26 : vector<8x128xf32>
    %c1_i32 = arith.constant 1 : i32
    %c0_19 = arith.constant 0 : index
    %c0_20 = arith.constant 0 : index
    %28 = vector.load %arg5[%c0_19, %c0_20] : memref<8x128xf32, #tpu.memory_space<vmem>>, vector<8x128xf32>
    tpu.vector_store %arg5[%c0_19, %c0_20], %20 {strides = array<i32>} : memref<8x128xf32, #tpu.memory_space<vmem>>, vector<8x128xf32>,
    %c0_21 = arith.constant 0 : index
    %c0_22 = arith.constant 0 : index
    %29 = vector.load %arg6[%c0_21, %c0_22] : memref<8x128xf32, #tpu.memory_space<vmem>>, vector<8x128xf32>
    tpu.vector_store %arg6[%c0_21, %c0_22], %21 {strides = array<i32>} : memref<8x128xf32, #tpu.memory_space<vmem>>, vector<8x128xf32>,
    %c0_23 = arith.constant 0 : index
    %c0_24 = arith.constant 0 : index
    %30 = vector.load %arg7[%c0_23, %c0_24] : memref<8x128xf32, #tpu.memory_space<vmem>>, vector<8x128xf32>
    tpu.vector_store %arg7[%c0_23, %c0_24], %23 {strides = array<i32>} : memref<8x128xf32, #tpu.memory_space<vmem>>, vector<8x128xf32>,
    %c0_25 = arith.constant 0 : index
    %c0_26 = arith.constant 0 : index
    %31 = vector.load %arg8[%c0_25, %c0_26] : memref<8x128xf32, #tpu.memory_space<vmem>>, vector<8x128xf32>
    tpu.vector_store %arg8[%c0_25, %c0_26], %25 {strides = array<i32>} : memref<8x128xf32, #tpu.memory_space<vmem>>, vector<8x128xf32>,
    %c0_27 = arith.constant 0 : index
    %c0_28 = arith.constant 0 : index
    %32 = vector.load %arg9[%c0_27, %c0_28] : memref<8x128xf32, #tpu.memory_space<vmem>>, vector<8x128xf32>
    tpu.vector_store %arg9[%c0_27, %c0_28], %27 {strides = array<i32>} : memref<8x128xf32, #tpu.memory_space<vmem>>, vector<8x128xf32>,
    %c0_i32_29 = arith.constant 0 : i32
    %33 = arith.cmpi eq, %arg1, %c0_i32_29 : i32
    %34 = arith.extui %33 : i1 to i32
    %c0_i32_30 = arith.constant 0 : i32
    %35 = arith.cmpi ne, %34, %c0_i32_30 : i32
    scf.if %35 {
      %c0_31 = arith.constant 0 : index
      %c0_32 = arith.constant 0 : index
      %36 = vector.load %arg5[%c0_31, %c0_32] : memref<8x128xf32, #tpu.memory_space<vmem>>, vector<8x128xf32>
      %37 = vector.shape_cast %36 : vector<8x128xf32> to vector<1x8x128xf32>
      %cst = arith.constant dense<0.000000e+00> : vector<1xf32>
      %38 = vector.multi_reduction <add>, %37, %cst [1, 2] : vector<1x8x128xf32> to vector<1xf32>
      %39 = vector.shape_cast %38 : vector<1xf32> to vector<1x1x1xf32>
      %40 = vector.extract %39[0, 0, 0] : f32 from vector<1x1x1xf32>
      %c0_33 = arith.constant 0 : index
      %c0_34 = arith.constant 0 : index
      %41 = vector.load %arg6[%c0_33, %c0_34] : memref<8x128xf32, #tpu.memory_space<vmem>>, vector<8x128xf32>
      %42 = vector.shape_cast %41 : vector<8x128xf32> to vector<1x8x128xf32>
      %cst_35 = arith.constant dense<0.000000e+00> : vector<1xf32>
      %43 = vector.multi_reduction <add>, %42, %cst_35 [1, 2] : vector<1x8x128xf32> to vector<1xf32>
      %44 = vector.shape_cast %43 : vector<1xf32> to vector<1x1x1xf32>
      %45 = vector.extract %44[0, 0, 0] : f32 from vector<1x1x1xf32>
      %c0_36 = arith.constant 0 : index
      %c0_37 = arith.constant 0 : index
      %46 = vector.load %arg7[%c0_36, %c0_37] : memref<8x128xf32, #tpu.memory_space<vmem>>, vector<8x128xf32>
      %47 = vector.shape_cast %46 : vector<8x128xf32> to vector<1x8x128xf32>
      %cst_38 = arith.constant dense<0.000000e+00> : vector<1xf32>
      %48 = vector.multi_reduction <add>, %47, %cst_38 [1, 2] : vector<1x8x128xf32> to vector<1xf32>
      %49 = vector.shape_cast %48 : vector<1xf32> to vector<1x1x1xf32>
      %50 = vector.extract %49[0, 0, 0] : f32 from vector<1x1x1xf32>
      %c0_39 = arith.constant 0 : index
      %c0_40 = arith.constant 0 : index
      %51 = vector.load %arg8[%c0_39, %c0_40] : memref<8x128xf32, #tpu.memory_space<vmem>>, vector<8x128xf32>
      %52 = vector.shape_cast %51 : vector<8x128xf32> to vector<1x8x128xf32>
      %cst_41 = arith.constant dense<0.000000e+00> : vector<1xf32>
      %53 = vector.multi_reduction <add>, %52, %cst_41 [1, 2] : vector<1x8x128xf32> to vector<1xf32>
      %54 = vector.shape_cast %53 : vector<1xf32> to vector<1x1x1xf32>
      %55 = vector.extract %54[0, 0, 0] : f32 from vector<1x1x1xf32>
      %c0_42 = arith.constant 0 : index
      %c0_43 = arith.constant 0 : index
      %56 = vector.load %arg9[%c0_42, %c0_43] : memref<8x128xf32, #tpu.memory_space<vmem>>, vector<8x128xf32>
      %57 = vector.shape_cast %56 : vector<8x128xf32> to vector<1x8x128xf32>
      %cst_44 = arith.constant dense<0.000000e+00> : vector<1xf32>
      %58 = vector.multi_reduction <add>, %57, %cst_44 [1, 2] : vector<1x8x128xf32> to vector<1xf32>
      %59 = vector.shape_cast %58 : vector<1xf32> to vector<1x1x1xf32>
      %60 = vector.extract %59[0, 0, 0] : f32 from vector<1x1x1xf32>
      %61 = arith.mulf %40, %45 : f32
      %cst_45 = arith.constant 1.024000e+03 : f32
      %62 = arith.divf %61, %cst_45 : f32
      %63 = arith.subf %60, %62 : f32
      %64 = arith.mulf %40, %40 : f32
      %cst_46 = arith.constant 1.024000e+03 : f32
      %65 = arith.divf %64, %cst_46 : f32
      %66 = arith.subf %50, %65 : f32
      %cst_47 = arith.constant 0.000000e+00 : f32
      %67 = arith.maximumf %66, %cst_47 : f32
      %68 = arith.mulf %45, %45 : f32
      %cst_48 = arith.constant 1.024000e+03 : f32
      %69 = arith.divf %68, %cst_48 : f32
      %70 = arith.subf %55, %69 : f32
      %cst_49 = arith.constant 0.000000e+00 : f32
      %71 = arith.maximumf %70, %cst_49 : f32
      %72 = math.sqrt %67 : f32
      %73 = math.sqrt %71 : f32
      %74 = arith.mulf %72, %73 : f32
      %cst_50 = arith.constant 9.99999993E-9 : f32
      %75 = arith.addf %74, %cst_50 : f32
      %76 = arith.divf %63, %75 : f32
      %77 = vector.broadcast %76 : f32 to vector<1x1x1xf32>
      %c0_51 = arith.constant 0 : index
      %c0_52 = arith.constant 0 : index
      %c0_53 = arith.constant 0 : index
      %78 = vector.load %arg4[%c0_51, %c0_52, %c0_53] : memref<1x1x1xf32, #tpu.memory_space<vmem>>, vector<1x1x1xf32>
      tpu.vector_store %arg4[%c0_51, %c0_52, %c0_53], %77 {strides = array<i32>} : memref<1x1x1xf32, #tpu.memory_space<vmem>>, vector<1x1x1xf32>,
    } else {
    }
    return
  }
  func.func @transform_0(%arg0: i32, %arg1: i32) -> (i32, i32, i32) {
    %c0_i32 = arith.constant 0 : i32
    %c0_i32_0 = arith.constant 0 : i32
    return %arg0, %arg1, %c0_i32 : i32, i32, i32
  }
  func.func @transform_1(%arg0: i32, %arg1: i32) -> (i32, i32, i32) {
    %c0_i32 = arith.constant 0 : i32
    %c0_i32_0 = arith.constant 0 : i32
    return %arg0, %arg1, %c0_i32 : i32, i32, i32
  }
  func.func @transform_2(%arg0: i32, %arg1: i32) -> (i32, i32, i32) {
    %c0_i32 = arith.constant 0 : i32
    %c0_i32_0 = arith.constant 0 : i32
    %c0_i32_1 = arith.constant 0 : i32
    return %arg0, %c0_i32, %c0_i32_0 : i32, i32, i32
  }
}

</mosaic_0001>

<llo_original>
// kernel: tpu_custom_call.1
$region0: #{tpu_custom_call.1}
  #allocation0 [shape = 'u32[]', space=smem, size = 0x4, offset = 0x4, fixed_abs, tag = 'smem constant byte address 0x4 - core index']
  #allocation1 [shape = 'u32[144,128]{1,0:T(1,128)}', space=vmem, size = 0x12000, scoped, tag = 'internal scratch']
  #allocation2 [shape = 'f32[8,128]{1,0:T(8,128)}', space=vmem, size = 0x1000, scoped, tag = 'scratch operand']
  #allocation3 [shape = 'f32[8,128]{1,0:T(8,128)}', space=vmem, size = 0x1000, scoped, tag = 'scratch operand']
  #allocation4 [shape = 'f32[8,128]{1,0:T(8,128)}', space=vmem, size = 0x1000, scoped, tag = 'scratch operand']
  #allocation5 [shape = 'f32[8,128]{1,0:T(8,128)}', space=vmem, size = 0x1000, scoped, tag = 'scratch operand']
  #allocation6 [shape = 'f32[8,128]{1,0:T(8,128)}', space=vmem, size = 0x1000, scoped, tag = 'scratch operand']
  #allocation7 [shape = 'f32[8,128]{1,0:T(8,128)}', space=vmem, size = 0x1000, scoped, tag = 'scratch operand']
  #allocation8 [shape = 'f32[8,128]{1,0:T(8,128)}', space=vmem, size = 0x1000, scoped, tag = 'scratch operand']
  %s0 = inlined_call_operand.hbm [shape: f32[2,8,128], index: 0, kind: input, shape index: {}]
  %s1 = inlined_call_operand.hbm [shape: f32[2,8,128], index: 1, kind: input, shape index: {}]
  %s2 = inlined_call_operand.vmem [shape: f32[2,1,1], index: 2, kind: output, shape index: {}]
  %s3 = sld [smem:[#allocation0]]
  $region57: #{tpu_custom_call.1} parent=0
    _
  %s5 = ssub.s32 1, %s3
  %s6 = scalar_select 0, %s5, %s3
  $region1: #{tpu_custom_call.1} parent=0
    #allocation9 [shape = 'u8[8192]{0}', space=vmem, size = 0x2000, scoped, tag = 'input window, operand 0']
    #allocation10 [shape = 's32[2]{0}', space=sflag, size = 0x8, scoped, tag = 'scoped memory for tpu_custom_call.1']
    #allocation11 [shape = 'u8[8192]{0}', space=vmem, size = 0x2000, scoped, tag = 'input window, operand 1']
    #allocation12 [shape = 's32[2]{0}', space=sflag, size = 0x8, scoped, tag = 'scoped memory for tpu_custom_call.1']
    %7 = vsyncpa [#allocation10], 0
    %s8 = scalar_lea.sflag [#allocation10], 1
    %9 = vsyncpa %s8, 0
    %10 = vsyncpa [#allocation12], 0
    %s11 = scalar_lea.sflag [#allocation12], 1
    %12 = vsyncpa %s11, 0
    loop: start=0, step=1, limit=4
    $region2: #{tpu_custom_call.1} parent=1 // loop_pre_header
      _
    $region3: #{tpu_custom_call.1} parent=1 // loop_header
      %s14 = sphi 0, %s18
      %p15 = scmp.ge.s32.totalorder %s14, 4
      %s21 = sphi 0, %s33
      %s22 = sphi 0, %s29
      %s23 = sphi 0, %s21
      %s24 = sphi 0, %s22
      %s25 = sphi 0, %s23
      %s26 = sphi 0, %s24
      %s38 = sphi 0, %s40
      %s41 = sphi 0, %s38
      %s42 = sphi 0, %s41
      %s58 = sphi 0, %s42
      %s66 = sphi 0, %s68
      %s69 = sphi 0, %s66
      %s70 = sphi 0, %s69
      %s86 = sphi 0, %s70
      %s92 = sphi 0, %s94
      %s95 = sphi 0, %s92
      %s96 = sphi 0, %s95
      %s112 = sphi 0, %s96
    $region4: #{tpu_custom_call.1} parent=1 // loop_header_branch
      %17 = sbr.rel (%p15) target = $region8
    $region5: #{tpu_custom_call.1} parent=1 // loop_body
      %s19 = ssub.s32 %s14, 1
      %s20 = ssub.s32 %s14, 2
      %s27 = sadd.s32 1, %s22
      %p28 = scmp.ge.s32.totalorder %s27, 1
      %s29 = scalar_select %p28, 0, %s27
      %s30 = sadd.s32 1, %s21
      %s31 = scalar_select %p28, %s30, %s21
      %p32 = scmp.ge.s32.totalorder %s31, 2
      %s33 = scalar_select %p32, 0, %s31
      %s34 = ssub.s32 %s21, %s33
      %s35 = ssub.s32 %s22, %s29
      %s36 = sor.u32 %s34, %s35
      %p37 = scmp.eq.s32.totalorder %s36, 0
      %s39 = sadd.s32 %s38, 1
      %s40 = scalar_select %p37, %s38, %s39
      %p43 = pneg %p37
      %p44 = scmp.eq.s32.totalorder %s14, 1
      %p45 = por %p43, %p44
      %p46 = scmp.ne.s32.totalorder %s38, %s41
      %p47 = scmp.eq.s32.totalorder %s14, 0
      %p48 = por %p46, %p47
      %p49 = scmp.ne.s32.totalorder %s38, %s41
      %p50 = scmp.eq.s32.totalorder %s19, 1
      %p51 = por %p49, %p50
      %p52 = scmp.ne.s32.totalorder %s41, %s42
      %p53 = scmp.eq.s32.totalorder %s19, 0
      %p54 = por %p52, %p53
      %p55 = scmp.ne.s32.totalorder %s41, %s42
      %p56 = scmp.eq.s32.totalorder %s20, 1
      %p57 = por %p55, %p56
      %p59 = scmp.ne.s32.totalorder %s42, %s58
      %p60 = scmp.eq.s32.totalorder %s20, 0
      %p61 = por %p59, %p60
      %s62 = ssub.s32 %s21, %s33
      %s63 = ssub.s32 %s22, %s29
      %s64 = sor.u32 %s62, %s63
      %p65 = scmp.eq.s32.totalorder %s64, 0
      %s67 = sadd.s32 %s66, 1
      %s68 = scalar_select %p65, %s66, %s67
      %p71 = pneg %p65
      %p72 = scmp.eq.s32.totalorder %s14, 1
      %p73 = por %p71, %p72
      %p74 = scmp.ne.s32.totalorder %s66, %s69
      %p75 = scmp.eq.s32.totalorder %s14, 0
      %p76 = por %p74, %p75
      %p77 = scmp.ne.s32.totalorder %s66, %s69
      %p78 = scmp.eq.s32.totalorder %s19, 1
      %p79 = por %p77, %p78
      %p80 = scmp.ne.s32.totalorder %s69, %s70
      %p81 = scmp.eq.s32.totalorder %s19, 0
      %p82 = por %p80, %p81
      %p83 = scmp.ne.s32.totalorder %s69, %s70
      %p84 = scmp.eq.s32.totalorder %s20, 1
      %p85 = por %p83, %p84
      %p87 = scmp.ne.s32.totalorder %s70, %s86
      %p88 = scmp.eq.s32.totalorder %s20, 0
      %p89 = por %p87, %p88
      %s90 = ssub.s32 %s21, %s33
      %p91 = scmp.eq.s32.totalorder %s90, 0
      %s93 = sadd.s32 %s92, 1
      %s94 = scalar_select %p91, %s92, %s93
      %p97 = pneg %p91
      %p98 = scmp.eq.s32.totalorder %s14, 1
      %p99 = por %p97, %p98
      %p100 = scmp.ne.s32.totalorder %s92, %s95
      %p101 = scmp.eq.s32.totalorder %s14, 0
      %p102 = por %p100, %p101
      %p103 = scmp.ne.s32.totalorder %s92, %s95
      %p104 = scmp.eq.s32.totalorder %s19, 1
      %p105 = por %p103, %p104
      %p106 = scmp.ne.s32.totalorder %s95, %s96
      %p107 = scmp.eq.s32.totalorder %s19, 0
      %p108 = por %p106, %p107
      %p109 = scmp.ne.s32.totalorder %s95, %s96
      %p110 = scmp.eq.s32.totalorder %s20, 1
      %p111 = por %p109, %p110
      %p113 = scmp.ne.s32.totalorder %s96, %s112
      %p114 = scmp.eq.s32.totalorder %s20, 0
      %p115 = por %p113, %p114
      %p116 = scmp.le.s32.totalorder 1, %s14
      %p117 = scmp.lt.s32.totalorder %s14, 3
      %p118 = pnand %p116, %p117
      %p119 = pneg %p118
      // Predicated region
      $region9: #{tpu_custom_call.1} parent=5 // pred_check
        _
      $region10: #{tpu_custom_call.1} parent=5 // pred_check_branch
        %121 = sbr.rel (%p118) target = $region12
      $region11: #{tpu_custom_call.1} parent=5 // pred_region
        %s122 = ssub.s32 %s14, 1
      $region12: #{tpu_custom_call.1} parent=5 // pred_fallthru
        _
      %p123 = scmp.lt.s32.totalorder %s14, 2
      // Predicated region
      $region13: #{tpu_custom_call.1} parent=5 // pred_check
        %p124 = pneg %p123
      $region14: #{tpu_custom_call.1} parent=5 // pred_check_branch
        %126 = sbr.rel (%p124) target = $region16
      $region15: #{tpu_custom_call.1} parent=5 // pred_region
        // Predicated region
        $region17: #{tpu_custom_call.1} parent=15 // pred_check
          %p127 = pneg %p48
        $region18: #{tpu_custom_call.1} parent=15 // pred_check_branch
          %129 = sbr.rel (%p127) target = $region20
        $region19: #{tpu_custom_call.1} parent=15 // pred_region
          %s130 = sand.u32 %s38, 1
          %s131 = scalar_lea.sflag [#allocation10], %s130
          %s132 = sand.u32 %s38, 1
          %s133 = smul.addr %s132, 8
          %s134 = scalar_lea.vmem [#allocation9], %s133
          %s136 = ssub.s32 128, 128
          %137 = vsyncadd %s131, %s136
          %s138 = sadd.s32 %s22, %s21
          %s139 = smul.addr %s138, 128
          %s140 = scalar_lea.hbm %s0, %s139
          %s142 = sshll.u32 %s134, 4
          %s143 = int_to_ptr.vmem [resolvable:$true] %s142
          %145 = dma.hbm_to_vmem [thread:$0]  %s140, 128, %s143, %s131
        $region20: #{tpu_custom_call.1} parent=15 // pred_fallthru
          _
        // Predicated region
        $region21: #{tpu_custom_call.1} parent=15 // pred_check
          %p146 = pneg %p76
        $region22: #{tpu_custom_call.1} parent=15 // pred_check_branch
          %148 = sbr.rel (%p146) target = $region24
        $region23: #{tpu_custom_call.1} parent=15 // pred_region
          %s149 = sand.u32 %s66, 1
          %s150 = scalar_lea.sflag [#allocation12], %s149
          %s151 = sand.u32 %s66, 1
          %s152 = smul.addr %s151, 8
          %s153 = scalar_lea.vmem [#allocation11], %s152
          %s155 = ssub.s32 128, 128
          %156 = vsyncadd %s150, %s155
          %s157 = sadd.s32 %s22, %s21
          %s158 = smul.addr %s157, 128
          %s159 = scalar_lea.hbm %s1, %s158
          %s161 = sshll.u32 %s153, 4
          %s162 = int_to_ptr.vmem [resolvable:$true] %s161
          %164 = dma.hbm_to_vmem [thread:$0]  %s159, 128, %s162, %s150
        $region24: #{tpu_custom_call.1} parent=15 // pred_fallthru
          _
      $region16: #{tpu_custom_call.1} parent=5 // pred_fallthru
        _
      %p165 = scmp.le.s32.totalorder 1, %s14
      %p166 = scmp.lt.s32.totalorder %s14, 3
      %p167 = pnand %p165, %p166
      %p168 = pneg %p167
      // Predicated region
      $region25: #{tpu_custom_call.1} parent=5 // pred_check
        _
      $region26: #{tpu_custom_call.1} parent=5 // pred_check_branch
        %170 = sbr.rel (%p167) target = $region28
      $region27: #{tpu_custom_call.1} parent=5 // pred_region
        %s171 = ssub.s32 %s14, 1
        %s172 = sand.u32 %s41, 1
        %s173 = scalar_lea.sflag [#allocation10], %s172
        %s174 = sand.u32 %s41, 1
        %s175 = smul.addr %s174, 8
        %s176 = scalar_lea.vmem [#allocation9], %s175
        // Predicated region
        $region29: #{tpu_custom_call.1} parent=27 // pred_check
          %p177 = pneg %p54
        $region30: #{tpu_custom_call.1} parent=27 // pred_check_branch
          %179 = sbr.rel (%p177) target = $region32
        $region31: #{tpu_custom_call.1} parent=27 // pred_region
          %180 = dma.done %s173, 128
        $region32: #{tpu_custom_call.1} parent=27 // pred_fallthru
          _
        %s181 = sand.u32 %s69, 1
        %s182 = scalar_lea.sflag [#allocation12], %s181
        %s183 = sand.u32 %s69, 1
        %s184 = smul.addr %s183, 8
        %s185 = scalar_lea.vmem [#allocation11], %s184
        // Predicated region
        $region33: #{tpu_custom_call.1} parent=27 // pred_check
          %p186 = pneg %p82
        $region34: #{tpu_custom_call.1} parent=27 // pred_check_branch
          %188 = sbr.rel (%p186) target = $region36
        $region35: #{tpu_custom_call.1} parent=27 // pred_region
          %189 = dma.done %s182, 128
        $region36: #{tpu_custom_call.1} parent=27 // pred_fallthru
          _
        %s190 = sand.u32 %s41, 1
        %s191 = scalar_lea.sflag [#allocation10], %s190
        %s192 = sand.u32 %s41, 1
        %s193 = smul.addr %s192, 8
        %s194 = scalar_lea.vmem [#allocation9], %s193
        %p195 = pneg %p54
        %p196 = pneg %p51
        %s197 = sand.u32 %s69, 1
        %s198 = scalar_lea.sflag [#allocation12], %s197
        %s199 = sand.u32 %s69, 1
        %s200 = smul.addr %s199, 8
        %s201 = scalar_lea.vmem [#allocation11], %s200
        %p202 = pneg %p82
        %p203 = pneg %p79
        %p204 = pneg %p108
        %p205 = pneg %p105
        %p206 = scmp.lt.s32.totalorder %s23, 1
        %s207 = scalar_select %p206, %s23, 1
        %s208 = scalar_lea.vmem %s2, %s207
        %p209 = scmp.lt.s32.totalorder %s23, 1
        %s210 = scalar_select %p209, %s23, 1
        %s211 = scalar_lea.vmem %s2, %s210
        %p212 = scmp.eq.s32.totalorder %s24, 0
        // Predicated region
        $region37: #{tpu_custom_call.1} parent=27 // pred_check
          %p213 = pneg %p212
        $region38: #{tpu_custom_call.1} parent=27 // pred_check_branch
          %215 = sbr.rel (%p213) target = $region40
        $region39: #{tpu_custom_call.1} parent=27 // pred_region
          %v216 = vld [vmem:[%s176] sm:$0xff]
          %v217 = vld [vmem:[%s185] sm:$0xff]
          %218 = vadd.xlane.f32.xlu0 %v216
          %v219 = vpop.xlane.xlu0 %218
          %v220 = vrot.slane %v219, 4
          %v221 = vadd.f32 %v219, %v220
          %v222 = vrot.slane %v221, 2
          %v223 = vadd.f32 %v221, %v222
          %v224 = vrot.slane %v223, 1
          %v225 = vadd.f32 %v223, %v224
          %s226 = vtos %v225
          %s227 = smul.f32 %s226, 0.0009765625
          %v228 = vstv %s227
          %229 = vst [vmem:[#allocation7] sm:$0xff] %v228
          %230 = vadd.xlane.f32.xlu0 %v217
          %v231 = vpop.xlane.xlu0 %230
          %v232 = vrot.slane %v231, 4
          %v233 = vadd.f32 %v231, %v232
          %v234 = vrot.slane %v233, 2
          %v235 = vadd.f32 %v233, %v234
          %v236 = vrot.slane %v235, 1
          %v237 = vadd.f32 %v235, %v236
          %s238 = vtos %v237
          %s239 = smul.f32 %s238, 0.0009765625
          %v240 = vstv %s239
          %241 = vst [vmem:[#allocation8] sm:$0xff] %v240
          %242 = vst [vmem:[#allocation2] sm:$0xff] 0.0
          %243 = vst [vmem:[#allocation3] sm:$0xff] 0.0
          %244 = vst [vmem:[#allocation4] sm:$0xff] 0.0
          %245 = vst [vmem:[#allocation5] sm:$0xff] 0.0
          %246 = vst [vmem:[#allocation6] sm:$0xff] 0.0
        $region40: #{tpu_custom_call.1} parent=27 // pred_fallthru
          _
        %v247 = vld [vmem:[#allocation7] sm:$0xff]
        %v248 = vld [vmem:[#allocation8] sm:$0xff]
        %v249 = vld [vmem:[#allocation2] sm:$0xff]
        %v250 = vld [vmem:[#allocation3] sm:$0xff]
        %v251 = vld [vmem:[#allocation4] sm:$0xff]
        %v252 = vld [vmem:[#allocation5] sm:$0xff]
        %v253 = vld [vmem:[#allocation6] sm:$0xff]
        %v254 = vld [vmem:[%s176] sm:$0xff]
        %v255 = vsub.f32 %v254, %v247
        %v256 = vld [vmem:[%s185] sm:$0xff]
        %v257 = vsub.f32 %v256, %v248
        %v258 = vadd.f32 %v249, %v255
        %v259 = vadd.f32 %v250, %v257
        %v260 = vmul.f32 %v255, %v255
        %v261 = vadd.f32 %v251, %v260
        %v262 = vmul.f32 %v257, %v257
        %v263 = vadd.f32 %v252, %v262
        %v264 = vmul.f32 %v255, %v257
        %v265 = vadd.f32 %v253, %v264
        %266 = vst [vmem:[#allocation2] sm:$0xff] %v258
        %267 = vst [vmem:[#allocation3] sm:$0xff] %v259
        %268 = vst [vmem:[#allocation4] sm:$0xff] %v261
        %269 = vst [vmem:[#allocation5] sm:$0xff] %v263
        %270 = vst [vmem:[#allocation6] sm:$0xff] %v265
        // Predicated region
        $region41: #{tpu_custom_call.1} parent=27 // pred_check
          %p271 = pneg %p212
        $region42: #{tpu_custom_call.1} parent=27 // pred_check_branch
          %273 = sbr.rel (%p271) target = $region44
        $region43: #{tpu_custom_call.1} parent=27 // pred_region
          %v274 = vld [vmem:[#allocation2] sm:$0xff]
          %275 = vadd.xlane.f32.xlu0 %v274
          %v276 = vpop.xlane.xlu0 %275
          %v277 = vrot.slane %v276, 4
          %v278 = vadd.f32 %v276, %v277
          %v279 = vrot.slane %v278, 2
          %v280 = vadd.f32 %v278, %v279
          %v281 = vrot.slane %v280, 1
          %v282 = vadd.f32 %v280, %v281
          %s283 = vtos %v282
          %v284 = vld [vmem:[#allocation3] sm:$0xff]
          %285 = vadd.xlane.f32.xlu0 %v284
          %v286 = vpop.xlane.xlu0 %285
          %v287 = vrot.slane %v286, 4
          %v288 = vadd.f32 %v286, %v287
          %v289 = vrot.slane %v288, 2
          %v290 = vadd.f32 %v288, %v289
          %v291 = vrot.slane %v290, 1
          %v292 = vadd.f32 %v290, %v291
          %s293 = vtos %v292
          %v294 = vld [vmem:[#allocation4] sm:$0xff]
          %295 = vadd.xlane.f32.xlu0 %v294
          %v296 = vpop.xlane.xlu0 %295
          %v297 = vrot.slane %v296, 4
          %v298 = vadd.f32 %v296, %v297
          %v299 = vrot.slane %v298, 2
          %v300 = vadd.f32 %v298, %v299
          %v301 = vrot.slane %v300, 1
          %v302 = vadd.f32 %v300, %v301
          %s303 = vtos %v302
          %v304 = vld [vmem:[#allocation5] sm:$0xff]
          %305 = vadd.xlane.f32.xlu0 %v304
          %v306 = vpop.xlane.xlu0 %305
          %v307 = vrot.slane %v306, 4
          %v308 = vadd.f32 %v306, %v307
          %v309 = vrot.slane %v308, 2
          %v310 = vadd.f32 %v308, %v309
          %v311 = vrot.slane %v310, 1
          %v312 = vadd.f32 %v310, %v311
          %s313 = vtos %v312
          %v314 = vld [vmem:[#allocation6] sm:$0xff]
          %315 = vadd.xlane.f32.xlu0 %v314
          %v316 = vpop.xlane.xlu0 %315
          %v317 = vrot.slane %v316, 4
          %v318 = vadd.f32 %v316, %v317
          %v319 = vrot.slane %v318, 2
          %v320 = vadd.f32 %v318, %v319
          %v321 = vrot.slane %v320, 1
          %v322 = vadd.f32 %v320, %v321
          %s323 = vtos %v322
          %s324 = smul.f32 %s283, %s293
          %v325 = vrcp.pop 1024.0
          %s326 = vtos %v325
          %s327 = smul.f32 %s324, %s326
          %s328 = ssub.f32 %s323, %s327
          %s329 = smul.f32 %s283, %s283
          %v330 = vrcp.pop 1024.0
          %s331 = vtos %v330
          %s332 = smul.f32 %s329, %s331
          %s333 = ssub.f32 %s303, %s332
          %s334 = smax.f32 %s333, 0.0
          %s335 = smul.f32 %s293, %s293
          %v336 = vrcp.pop 1024.0
          %s337 = vtos %v336
          %s338 = smul.f32 %s335, %s337
          %s339 = ssub.f32 %s313, %s338
          %s340 = smax.f32 %s339, 0.0
          %v341 = vstv %s334
          %v342 = vrsqrt.pop %v341
          %v343 = vmul.f32 %v341, %v342
          %vm344 = vcmp.eq.f32.partialorder %v341, inf
          %v345 = vsel %vm344, %v341, %v343
          %vm346 = vcmp.eq.f32.partialorder %v341, 0.0
          %v347 = vand.u32 %v341, 2147483648
          %v348 = vsel %vm346, %v347, %v345
          %s349 = vtos %v348
          %v350 = vstv %s340
          %v351 = vrsqrt.pop %v350
          %v352 = vmul.f32 %v350, %v351
          %vm353 = vcmp.eq.f32.partialorder %v350, inf
          %v354 = vsel %vm353, %v350, %v352
          %vm355 = vcmp.eq.f32.partialorder %v350, 0.0
          %v356 = vand.u32 %v350, 2147483648
          %v357 = vsel %vm355, %v356, %v354
          %s358 = vtos %v357
          %s359 = smul.f32 %s349, %s358
          %s360 = sadd.f32 %s359, 1e-08
          %v361 = vstv %s360
          %v362 = vrcp.pop %v361
          %s363 = vtos %v362
          %s364 = smul.f32 %s328, %s363
          %v365 = vstv %s364
          %vm366 = vcmask 0
          %367 = vst.msk [vmem:[%s211] sm:$0x1] %vm366, %v365
        $region44: #{tpu_custom_call.1} parent=27 // pred_fallthru
          _
        %p368 = scmp.lt.s32.totalorder %s23, 1
        %s369 = scalar_select %p368, %s23, 1
        %s370 = scalar_lea.vmem %s2, %s369
        // Predicated region
        $region45: #{tpu_custom_call.1} parent=27 // pred_check
          %p371 = pneg %p105
        $region46: #{tpu_custom_call.1} parent=27 // pred_check_branch
          %373 = sbr.rel (%p371) target = $region48
        $region47: #{tpu_custom_call.1} parent=27 // pred_region
          _
        $region48: #{tpu_custom_call.1} parent=27 // pred_fallthru
          _
      $region28: #{tpu_custom_call.1} parent=5 // pred_fallthru
        _
      %p374 = scmp.le.s32.totalorder 2, %s14
      // Predicated region
      $region49: #{tpu_custom_call.1} parent=5 // pred_check
        %p375 = pneg %p374
      $region50: #{tpu_custom_call.1} parent=5 // pred_check_branch
        %377 = sbr.rel (%p375) target = $region52
      $region51: #{tpu_custom_call.1} parent=5 // pred_region
        %s378 = ssub.s32 %s14, 2
        // Predicated region
        $region53: #{tpu_custom_call.1} parent=51 // pred_check
          %p379 = pneg %p111
        $region54: #{tpu_custom_call.1} parent=51 // pred_check_branch
          %381 = sbr.rel (%p379) target = $region56
        $region55: #{tpu_custom_call.1} parent=51 // pred_region
          %p382 = scmp.lt.s32.totalorder %s25, 1
          %s383 = scalar_select %p382, %s25, 1
          %s384 = scalar_lea.vmem %s2, %s383
        $region56: #{tpu_custom_call.1} parent=51 // pred_fallthru
          _
      $region52: #{tpu_custom_call.1} parent=5 // pred_fallthru
        _
    $region6: #{tpu_custom_call.1} parent=1 // loop_footer
      %s18 = sadd.s32 1, %s14
    $region7: #{tpu_custom_call.1} parent=1 // loop_footer_branch
      %13 = sbr.rel target = $region3
    $region8: #{tpu_custom_call.1} parent=1 // loop_exit
      _
    %385 = vsyncpa [#allocation10], 1
    %s386 = scalar_lea.sflag [#allocation10], 1
    %387 = vsyncpa %s386, 1
    %388 = vsyncpa [#allocation12], 1
    %s389 = scalar_lea.sflag [#allocation12], 1
    %390 = vsyncpa %s389, 1

</llo_original>
